<compile_context>
chip_gen: v6e
topology: v6e:2x2x1
jax: 0.10.0
libtpu: 0.0.40
codegen_flags: <defaults>
</compile_context>

<pallas_src>
import jax
import jax.numpy as jnp
from jax.experimental import pallas as pl
from jax.experimental.pallas import tpu as pltpu


def _round_up(n, m):
    return ((n + m - 1) // m) * m


def _mlp_kernel(x_ref, *rest):
    """Fused Linear -> ReLU -> ... -> Linear over one (tm, in_dim) row tile.

    rest = (w_0, ..., w_{L-1}, o_ref).  Weights are (in, out), bf16, fully
    VMEM-resident (constant index_map).  x is loaded in its HBM dtype (f32) and
    cast to the weight dtype in-register; matmuls accumulate in f32 on the MXU
    and hidden activations are cast back to bf16 before the next matmul.
    """
    *w_refs, o_ref = rest
    compute_dtype = w_refs[0].dtype
    h = x_ref[...].astype(compute_dtype)
    for w_ref in w_refs[:-1]:
        acc = jnp.dot(h, w_ref[...], preferred_element_type=jnp.float32)
        h = jnp.maximum(acc, 0.0).astype(compute_dtype)
    out = jnp.dot(h, w_refs[-1][...], preferred_element_type=jnp.float32)
    o_ref[...] = out.astype(o_ref.dtype)


def mlp_pallas(x, weights, *, out_dtype=jnp.bfloat16, tm_target=512):
    """x: (R, in_dim) float array.  weights: list of (in, out) matrices (bf16).

    Returns (R, out_dim) in out_dtype.  No padding / slicing passes in the
    wrapper: boundary row tiles are handled by Pallas' masked boundary block.
    """
    R, in_dim = x.shape
    out_dim = weights[-1].shape[1]

    # Row tiling.
    if R <= tm_target:
        tm = R                              # single step; block == full array dims
    else:
        n_tiles = pl.cdiv(R, tm_target)
        if n_tiles % 2 == 1:                # even tile count: balance v7x's 2 TCs
            n_tiles += 1
        tm = _round_up(pl.cdiv(R, n_tiles), 16)   # bf16 sublane packing
    grid = pl.cdiv(R, tm)

    in_specs = [pl.BlockSpec((tm, in_dim), lambda i: (i, 0))]
    for w in weights:
        wi, wo = w.shape
        in_specs.append(pl.BlockSpec((wi, wo), lambda i: (0, 0)))
    out_spec = pl.BlockSpec((tm, out_dim), lambda i: (i, 0))

    x_bytes = jnp.dtype(x.dtype).itemsize
    o_bytes = jnp.dtype(out_dtype).itemsize
    w_total_bytes = sum(int(w.shape[0]) * int(w.shape[1]) * jnp.dtype(w.dtype).itemsize
                        for w in weights)
    max_width = max(int(w.shape[1]) for w in weights)

    # VMEM budget: double-buffered x/out tiles, (conservatively) double-buffered
    # weights, plus intermediate-activation scratch (f32 acc + bf16 h per live layer).
    vmem_est = (2 * tm * in_dim * x_bytes
                + 2 * tm * out_dim * o_bytes
                + 2 * w_total_bytes
                + 2 * tm * max_width * 6)
    cp_kwargs = dict(dimension_semantics=("parallel",))
    default_scoped = 32 * 1024 * 1024
    if vmem_est > default_scoped:
        try:
            phys_vmem = int(pltpu.get_tpu_info().vmem_capacity_bytes)
        except Exception:
            phys_vmem = 64 * 1024 * 1024    # conservative fallback (v7x)
        cp_kwargs["vmem_limit_bytes"] = min(int(vmem_est * 1.25),
                                            int(phys_vmem * 0.8))

    flops = sum(2 * R * int(w.shape[0]) * int(w.shape[1]) for w in weights)
    bytes_accessed = R * in_dim * x_bytes + w_total_bytes + R * out_dim * o_bytes
    cost = pl.CostEstimate(flops=flops, transcendentals=0,
                           bytes_accessed=bytes_accessed)

    return pl.pallas_call(
        _mlp_kernel,
        out_shape=jax.ShapeDtypeStruct((R, out_dim), out_dtype),
        grid_spec=pltpu.PrefetchScalarGridSpec(
            num_scalar_prefetch=0,
            grid=(grid,),
            in_specs=in_specs,
            out_specs=out_spec,
        ),
        compiler_params=pltpu.CompilerParams(**cp_kwargs),
        cost_estimate=cost,
    )(x, *weights)


def prepare_mlp_weights(torch_weights, compute_dtype=jnp.bfloat16):
    """One-time weight prep (hoisted out of forward): (out, in) -> (in, out), bf16."""
    return [jnp.asarray(w).T.astype(compute_dtype) for w in torch_weights]


def mlp_forward(x, prepared_weights, *, out_dtype=jnp.bfloat16, tm_target=512):
    """x: (B, N, input_size). Mirrors MLP.forward with is_bias=False, use_bn=False."""
    # TODO(synk): use_bn=True branch (BatchNorm1d over the output channel) is not
    # implemented; the module's default (use_bn=False) is what is mirrored here.
    B, N, Cin = x.shape
    out_dim = prepared_weights[-1].shape[1]
    x2 = x.reshape(B * N, Cin)              # contiguous view; no cast/pad passes
    out2 = mlp_pallas(x2, prepared_weights, out_dtype=out_dtype, tm_target=tm_target)
    return out2.reshape(B, N, out_dim)


def make_mlp_params(key, input_size, output_size, hidden_size=128, n_hidden_layers=2):
    """Deterministic init, PyTorch nn.Linear convention: W has shape (out, in)."""
    dims = [(hidden_size, input_size)]
    dims += [(hidden_size, hidden_size)] * (n_hidden_layers - 1)
    dims += [(output_size, hidden_size)]
    ws = []
    for d in dims:
        key, sub = jax.random.split(key)
        bound = 1.0 / jnp.sqrt(d[1])
        ws.append(jax.random.uniform(sub, d, jnp.float32, -bound, bound))
    return ws


def mlp_reference(x, torch_weights):
    """Pure-JAX f32 reference of the PyTorch forward (no bias, no BN)."""
    h = x
    n = len(torch_weights)
    for i, w in enumerate(torch_weights):
        h = jnp.einsum("bnc,oc->bno", h, w)
        if i < n - 1:
            h = jnp.maximum(h, 0.0)
    return h


if __name__ == "__main__":
    key = jax.random.PRNGKey(0)
    k_x, k_w, k_x2 = jax.random.split(key, 3)

    input_size, hidden_size, output_size = 32, 128, 16
    n_hidden_layers = 2
    torch_weights = make_mlp_params(k_w, input_size, output_size,
                                    hidden_size, n_hidden_layers)
    weights = prepare_mlp_weights(torch_weights)   # one-time prep, out of the hot path

    # Small shape: single grid step, block == full array dims.
    B, N = 2, 8
    x = jax.random.normal(k_x, (B, N, input_size), jnp.float32)
    out = mlp_forward(x, weights)
    jax.block_until_ready(out)
    ref = mlp_reference(x, torch_weights)
    assert out.shape == (B, N, output_size), out.shape
    assert out.dtype == jnp.bfloat16, out.dtype
    assert jnp.allclose(out.astype(jnp.float32), ref, atol=5e-2, rtol=5e-2), \
        "mismatch vs reference (small)"

    # Larger, non-multiple-of-tile shape: R=1200 -> 4 tiles of 304 rows (even grid
    # for v7x), last block write-masked by Pallas (no wrapper padding).
    B2, N2 = 2, 600
    xb = jax.random.normal(k_x2, (B2, N2, input_size), jnp.float32)
    outb = mlp_forward(xb, weights)
    jax.block_until_ready(outb)
    refb = mlp_reference(xb, torch_weights)
    assert outb.shape == (B2, N2, output_size), outb.shape
    assert jnp.allclose(outb.astype(jnp.float32), refb, atol=5e-2, rtol=5e-2), \
        "mismatch vs reference (large)"

    print("KERNEL_OK")
</pallas_src>

<mosaic_0001>
module attributes {stable_mosaic.version = 11 : i64} {
  func.func @_mlp_kernel(%arg0: i32, %arg1: memref<16x32xf32, #tpu.memory_space<vmem>>, %arg2: memref<32x128xbf16, #tpu.memory_space<vmem>>, %arg3: memref<128x128xbf16, #tpu.memory_space<vmem>>, %arg4: memref<128x16xbf16, #tpu.memory_space<vmem>>, %arg5: memref<16x16xbf16, #tpu.memory_space<vmem>>) attributes {dimension_semantics = [#tpu.dimension_semantics<parallel>], iteration_bounds = array<i64: 1>, scalar_prefetch = 0 : i64, scratch_operands = 0 : i64, tpu.core_type = #tpu.core_type<tc>, window_params = [{transform_indices = @transform_0, window_bounds = array<i64: 16, 32>}, {pipeline_mode = #tpu.pipeline_mode<synchronous>, transform_indices = @transform_1, window_bounds = array<i64: 32, 128>}, {pipeline_mode = #tpu.pipeline_mode<synchronous>, transform_indices = @transform_2, window_bounds = array<i64: 128, 128>}, {pipeline_mode = #tpu.pipeline_mode<synchronous>, transform_indices = @transform_3, window_bounds = array<i64: 128, 16>}, {transform_indices = @transform_4, window_bounds = array<i64: 16, 16>}]} {
    %c0 = arith.constant 0 : index
    %c0_0 = arith.constant 0 : index
    %0 = vector.load %arg1[%c0, %c0_0] : memref<16x32xf32, #tpu.memory_space<vmem>>, vector<16x32xf32>
    %1 = arith.truncf %0 : vector<16x32xf32> to vector<16x32xbf16>
    %c0_1 = arith.constant 0 : index
    %c0_2 = arith.constant 0 : index
    %2 = vector.load %arg2[%c0_1, %c0_2] : memref<32x128xbf16, #tpu.memory_space<vmem>>, vector<32x128xbf16>
    %cst = arith.constant dense<0.000000e+00> : vector<16x128xf32>
    %3 = tpu.matmul %1, %2, %cst {dimension_numbers = #tpu.dot_dimension_numbers<[1], [0], [0], [1], [0, 0, 1, 1], [], []>} : vector<16x32xbf16>, vector<32x128xbf16>, vector<16x128xf32> -> vector<16x128xf32>
    %cst_3 = arith.constant 0.000000e+00 : f32
    %4 = vector.broadcast %cst_3 : f32 to vector<16x128xf32>
    %5 = arith.maximumf %3, %4 : vector<16x128xf32>
    %6 = arith.truncf %5 : vector<16x128xf32> to vector<16x128xbf16>
    %c0_4 = arith.constant 0 : index
    %c0_5 = arith.constant 0 : index
    %7 = vector.load %arg3[%c0_4, %c0_5] : memref<128x128xbf16, #tpu.memory_space<vmem>>, vector<128x128xbf16>
    %cst_6 = arith.constant dense<0.000000e+00> : vector<16x128xf32>
    %8 = tpu.matmul %6, %7, %cst_6 {dimension_numbers = #tpu.dot_dimension_numbers<[1], [0], [0], [1], [0, 0, 1, 1], [], []>} : vector<16x128xbf16>, vector<128x128xbf16>, vector<16x128xf32> -> vector<16x128xf32>
    %cst_7 = arith.constant 0.000000e+00 : f32
    %9 = vector.broadcast %cst_7 : f32 to vector<16x128xf32>
    %10 = arith.maximumf %8, %9 : vector<16x128xf32>
    %11 = arith.truncf %10 : vector<16x128xf32> to vector<16x128xbf16>
    %c0_8 = arith.constant 0 : index
    %c0_9 = arith.constant 0 : index
    %12 = vector.load %arg4[%c0_8, %c0_9] : memref<128x16xbf16, #tpu.memory_space<vmem>>, vector<128x16xbf16>
    %cst_10 = arith.constant dense<0.000000e+00> : vector<16x16xf32>
    %13 = tpu.matmul %11, %12, %cst_10 {dimension_numbers = #tpu.dot_dimension_numbers<[1], [0], [0], [1], [0, 0, 1, 1], [], []>} : vector<16x128xbf16>, vector<128x16xbf16>, vector<16x16xf32> -> vector<16x16xf32>
    %14 = arith.truncf %13 : vector<16x16xf32> to vector<16x16xbf16>
    %c0_11 = arith.constant 0 : index
    %c0_12 = arith.constant 0 : index
    %15 = vector.load %arg5[%c0_11, %c0_12] : memref<16x16xbf16, #tpu.memory_space<vmem>>, vector<16x16xbf16>
    tpu.vector_store %arg5[%c0_11, %c0_12], %14 {strides = array<i32>} : memref<16x16xbf16, #tpu.memory_space<vmem>>, vector<16x16xbf16>,
    return
  }
  func.func @transform_0(%arg0: i32) -> (i32, i32) {
    %c0_i32 = arith.constant 0 : i32
    %c0_i32_0 = arith.constant 0 : i32
    return %arg0, %c0_i32 : i32, i32
  }
  func.func @transform_1(%arg0: i32) -> (i32, i32) {
    %c0_i32 = arith.constant 0 : i32
    %c0_i32_0 = arith.constant 0 : i32
    %c0_i32_1 = arith.constant 0 : i32
    return %c0_i32, %c0_i32_0 : i32, i32
  }
  func.func @transform_2(%arg0: i32) -> (i32, i32) {
    %c0_i32 = arith.constant 0 : i32
    %c0_i32_0 = arith.constant 0 : i32
    %c0_i32_1 = arith.constant 0 : i32
    return %c0_i32, %c0_i32_0 : i32, i32
  }
  func.func @transform_3(%arg0: i32) -> (i32, i32) {
    %c0_i32 = arith.constant 0 : i32
    %c0_i32_0 = arith.constant 0 : i32
    %c0_i32_1 = arith.constant 0 : i32
    return %c0_i32, %c0_i32_0 : i32, i32
  }
  func.func @transform_4(%arg0: i32) -> (i32, i32) {
    %c0_i32 = arith.constant 0 : i32
    %c0_i32_0 = arith.constant 0 : i32
    return %arg0, %c0_i32 : i32, i32
  }
}

</mosaic_0001>

<llo_original>
// kernel: tpu_custom_call.1
$region0: #{tpu_custom_call.1}
  #allocation0 [shape = 'u32[]', space=smem, size = 0x4, offset = 0x4, fixed_abs, tag = 'smem constant byte address 0x4 - core index']
  #allocation1 [shape = 'u32[144,128]{1,0:T(1,128)}', space=vmem, size = 0x12000, scoped, tag = 'internal scratch']
  %s0 = inlined_call_operand.hbm [shape: f32[16,32], index: 0, kind: input, shape index: {}]
  %s1 = inlined_call_operand.hbm [shape: bf16[32,128], index: 1, kind: input, shape index: {}]
  %s2 = inlined_call_operand.vmem [shape: bf16[128,128], index: 2, kind: input, shape index: {}]
  %s3 = inlined_call_operand.vmem [shape: bf16[128,16], index: 3, kind: input, shape index: {}]
  %s4 = inlined_call_operand.hbm [shape: bf16[16,16], index: 4, kind: output, shape index: {}]
  %s5 = sld [smem:[#allocation0]]
  $region34: #{tpu_custom_call.1} parent=0
    _
  %s7 = ssub.s32 1, %s5
  %s8 = scalar_select 0, %s7, %s5
  $region1: #{tpu_custom_call.1} parent=0
    #allocation2 [shape = 'u8[8192]{0}', space=vmem, size = 0x2000, scoped, tag = 'input window, operand 0, single buffered']
    #allocation3 [shape = 's32[1]{0}', space=sflag, size = 0x4, scoped, tag = 'scoped memory for tpu_custom_call.1']
    #allocation4 [shape = 's32[1]{0}', space=sflag, size = 0x4, scoped, tag = 'scoped memory for tpu_custom_call.1']
    #allocation5 [shape = 'u8[8192]{0}', space=vmem, size = 0x2000, scoped, tag = 'input window, operand 1, single buffered']
    #allocation6 [shape = 's32[1]{0}', space=sflag, size = 0x4, scoped, tag = 'scoped memory for tpu_custom_call.1']
    #allocation7 [shape = 'u8[4096]{0}', space=vmem, size = 0x1000, scoped, tag = 'output window, operand 0, single buffered']
    %9 = vsyncpa [#allocation3], 0
    %10 = vsyncpa [#allocation6], 0
    %11 = vsyncpa [#allocation4], 0
    // Predicated region
    $region2: #{tpu_custom_call.1} parent=1 // pred_check
      _
    $region3: #{tpu_custom_call.1} parent=1 // pred_check_branch
      %13 = sbr.rel (0) target = $region5
    $region4: #{tpu_custom_call.1} parent=1 // pred_region
      %s15 = ssub.s32 256, 256
      %16 = vsyncadd [#allocation3], %s15
      %s17 = sshll.u32 [#allocation2], 4
      %s18 = int_to_ptr.vmem [resolvable:$true] %s17
      %23 = dma.hbm_to_vmem [thread:$0]  %s0, 256, %s18, [#allocation3], 128, 128, 8
    $region5: #{tpu_custom_call.1} parent=1 // pred_fallthru
      _
    // Predicated region
    $region6: #{tpu_custom_call.1} parent=1 // pred_check
      _
    $region7: #{tpu_custom_call.1} parent=1 // pred_check_branch
      %25 = sbr.rel (0) target = $region9
    $region8: #{tpu_custom_call.1} parent=1 // pred_region
      %s27 = ssub.s32 256, 256
      %28 = vsyncadd [#allocation6], %s27
      %s29 = sshll.u32 [#allocation5], 4
      %s30 = int_to_ptr.vmem [resolvable:$true] %s29
      %35 = dma.hbm_to_vmem [thread:$0]  %s1, 256, %s30, [#allocation6], 64, 64, 4
    $region9: #{tpu_custom_call.1} parent=1 // pred_fallthru
      _
    // Predicated region
    $region10: #{tpu_custom_call.1} parent=1 // pred_check
      _
    $region11: #{tpu_custom_call.1} parent=1 // pred_check_branch
      %37 = sbr.rel (0) target = $region13
    $region12: #{tpu_custom_call.1} parent=1 // pred_region
      _
    $region13: #{tpu_custom_call.1} parent=1 // pred_fallthru
      _
    // Predicated region
    $region14: #{tpu_custom_call.1} parent=1 // pred_check
      _
    $region15: #{tpu_custom_call.1} parent=1 // pred_check_branch
      %39 = sbr.rel (0) target = $region17
    $region16: #{tpu_custom_call.1} parent=1 // pred_region
      _
    $region17: #{tpu_custom_call.1} parent=1 // pred_fallthru
      _
    // Predicated region
    $region18: #{tpu_custom_call.1} parent=1 // pred_check
      _
    $region19: #{tpu_custom_call.1} parent=1 // pred_check_branch
      %41 = sbr.rel (0) target = $region21
    $region20: #{tpu_custom_call.1} parent=1 // pred_region
      %42 = dma.done [#allocation3], 256
    $region21: #{tpu_custom_call.1} parent=1 // pred_fallthru
      _
    // Predicated region
    $region22: #{tpu_custom_call.1} parent=1 // pred_check
      _
    $region23: #{tpu_custom_call.1} parent=1 // pred_check_branch
      %44 = sbr.rel (0) target = $region25
    $region24: #{tpu_custom_call.1} parent=1 // pred_region
      %45 = dma.done [#allocation6], 256
    $region25: #{tpu_custom_call.1} parent=1 // pred_fallthru
      _
    %v47 = vld [vmem:[#allocation2] sm:$0xff]
    %v48 = vld [vmem:[#allocation2 + $0x8] sm:$0xff]
    %v49 = vpack.c.bf16 %v48, %v47
    %v50 = vld [vmem:[#allocation5] sm:$0xf]
    %v51 = vld [vmem:[#allocation5 + $0x4] sm:$0xf]
    %v52 = vld [vmem:[#allocation5 + $0x8] sm:$0xf]
    %v53 = vld [vmem:[#allocation5 + $0xc] sm:$0xf]
    %v58 = vunpack.c.l.b16 %v50
    %v59 = vunpack.c.l.b16 %v51
    %v60 = vunpack.c.l.b16 %v52
    %v61 = vunpack.c.l.b16 %v53
    %v62 = vpack.c.b16 %v59, %v58
    %v63 = vpack.c.b16 %v61, %v60
    %vm66 = vcmask 261120
    %v68 = vsel %vm66, %v49, 0
    %70 = vmatprep.subr.bf16.mxu0 0
    %71 = vmatpush1.bf16.msra.mxu0 0
    %72 = vmatprep.subr.bf16.mxu0 0
    %73 = vmatpush1.bf16.msra.mxu0 0
    %74 = vmatprep.subr.bf16.mxu0 0
    %75 = vmatpush1.bf16.msra.mxu0 0
    %76 = vmatprep.subr.bf16.mxu0 0
    %77 = vmatpush1.bf16.msra.mxu0 0
    %78 = vmatprep.subr.bf16.mxu0 0
    %79 = vmatpush1.bf16.msra.mxu0 0
    %80 = vmatprep.subr.bf16.mxu0 0
    %81 = vmatpush1.bf16.msra.mxu0 0
    %82 = vmatprep.subr.bf16.mxu0 0
    %83 = vmatpush1.bf16.msra.mxu0 %v63
    %84 = vmatprep.subr.bf16.mxu0 0
    %85 = vmatpush1.bf16.msra.mxu0 %v62
    %86 = vmatprep.subr.bf16.mxu0 0
    %87 = vmatpush2.bf16.msra.mxu0 0
    %88 = vmatprep.subr.bf16.mxu0 0
    %89 = vmatpush2.bf16.msra.mxu0 0
    %90 = vmatprep.subr.bf16.mxu0 0
    %91 = vmatpush2.bf16.msra.mxu0 0
    %92 = vmatprep.subr.bf16.mxu0 0
    %93 = vmatpush2.bf16.msra.mxu0 0
    %94 = vmatprep.subr.bf16.mxu0 0
    %95 = vmatpush2.bf16.msra.mxu0 0
    %96 = vmatprep.subr.bf16.mxu0 0
    %97 = vmatpush2.bf16.msra.mxu0 0
    %98 = vmatprep.subr.bf16.mxu0 0
    %99 = vmatpush2.bf16.msra.mxu0 0
    %100 = vmatprep.subr.bf16.mxu0 0
    %101 = vmatpush2.bf16.msra.mxu0 0
    %102 = vmatprep.mubr.bf16.mxu0 0
    %103 = vmatmul.mubr.bf16.gmra.mxu0 %v68
    %v104 = vpop.f32.mrf.mxu0
    %v105 = vadd.f32 0.0, %v104
    %v106 = vpop.f32.mrf.mxu0
    %v107 = vpop.f32.mrf.mxu0
    %v108 = vadd.f32 0.0, %v107
    %v109 = vpop.f32.mrf.mxu0
    %110 = vdwg.mxu0
    %v111 = vmax.f32 %v105, 0.0
    %v112 = vmax.f32 %v108, 0.0
    %v113 = vpack.c.bf16 %v112, %v111
    %v114 = vld [vmem:[%s2] sm:$0xf]
    %v115 = vld [vmem:[%s2 + $0x4] sm:$0xf]
    %v116 = vld [vmem:[%s2 + $0x8] sm:$0xf]
    %v117 = vld [vmem:[%s2 + $0xc] sm:$0xf]
    %v118 = vld [vmem:[%s2 + $0x10] sm:$0xf]
    %v119 = vld [vmem:[%s2 + $0x14] sm:$0xf]
    %v120 = vld [vmem:[%s2 + $0x18] sm:$0xf]
    %v121 = vld [vmem:[%s2 + $0x1c] sm:$0xf]
    %v122 = vld [vmem:[%s2 + $0x20] sm:$0xf]
    %v123 = vld [vmem:[%s2 + $0x24] sm:$0xf]
    %v124 = vld [vmem:[%s2 + $0x28] sm:$0xf]
    %v125 = vld [vmem:[%s2 + $0x2c] sm:$0xf]
    %v126 = vld [vmem:[%s2 + $0x30] sm:$0xf]
    %v127 = vld [vmem:[%s2 + $0x34] sm:$0xf]
    %v128 = vld [vmem:[%s2 + $0x38] sm:$0xf]
    %v129 = vld [vmem:[%s2 + $0x3c] sm:$0xf]
    %v146 = vunpack.c.l.b16 %v114
    %v147 = vunpack.c.l.b16 %v115
    %v148 = vunpack.c.l.b16 %v116
    %v149 = vunpack.c.l.b16 %v117
    %v150 = vunpack.c.l.b16 %v118
    %v151 = vunpack.c.l.b16 %v119
    %v152 = vunpack.c.l.b16 %v120
    %v153 = vunpack.c.l.b16 %v121
    %v154 = vunpack.c.l.b16 %v122
    %v155 = vunpack.c.l.b16 %v123
    %v156 = vunpack.c.l.b16 %v124
    %v157 = vunpack.c.l.b16 %v125
    %v158 = vunpack.c.l.b16 %v126
    %v159 = vunpack.c.l.b16 %v127
    %v160 = vunpack.c.l.b16 %v128
    %v161 = vunpack.c.l.b16 %v129
    %v162 = vpack.c.b16 %v147, %v146
    %v163 = vpack.c.b16 %v149, %v148
    %v164 = vpack.c.b16 %v151, %v150
    %v165 = vpack.c.b16 %v153, %v152
    %v166 = vpack.c.b16 %v155, %v154
    %v167 = vpack.c.b16 %v157, %v156
    %v168 = vpack.c.b16 %v159, %v158
    %v169 = vpack.c.b16 %v161, %v160
    %178 = vmatprep.subr.bf16.mxu0 0
    %179 = vmatpush1.bf16.msra.mxu0 %v169
    %180 = vmatprep.subr.bf16.mxu0 0
    %181 = vmatpush1.bf16.msra.mxu0 %v168
    %182 = vmatprep.subr.bf16.mxu0 0
    %183 = vmatpush1.bf16.msra.mxu0 %v167
    %184 = vmatprep.subr.bf16.mxu0 0
    %185 = vmatpush1.bf16.msra.mxu0 %v166
    %186 = vmatprep.subr.bf16.mxu0 0
    %187 = vmatpush1.bf16.msra.mxu0 %v165
    %188 = vmatprep.subr.bf16.mxu0 0
    %189 = vmatpush1.bf16.msra.mxu0 %v164
    %190 = vmatprep.subr.bf16.mxu0 0
    %191 = vmatpush1.bf16.msra.mxu0 %v163
    %192 = vmatprep.subr.bf16.mxu0 0
    %193 = vmatpush1.bf16.msra.mxu0 %v162
    %194 = vmatprep.subr.bf16.mxu0 0
    %195 = vmatpush2.bf16.msra.mxu0 0
    %196 = vmatprep.subr.bf16.mxu0 0
    %197 = vmatpush2.bf16.msra.mxu0 0
    %198 = vmatprep.subr.bf16.mxu0 0
    %199 = vmatpush2.bf16.msra.mxu0 0
    %200 = vmatprep.subr.bf16.mxu0 0
    %201 = vmatpush2.bf16.msra.mxu0 0
    %202 = vmatprep.subr.bf16.mxu0 0
    %203 = vmatpush2.bf16.msra.mxu0 0
    %204 = vmatprep.subr.bf16.mxu0 0
    %205 = vmatpush2.bf16.msra.mxu0 0
    %206 = vmatprep.subr.bf16.mxu0 0
    %207 = vmatpush2.bf16.msra.mxu0 0
    %208 = vmatprep.subr.bf16.mxu0 0
    %209 = vmatpush2.bf16.msra.mxu0 0
    %210 = vmatprep.mubr.bf16.mxu0 0
    %211 = vmatmul.mubr.bf16.gmra.mxu0 %v113
    %v212 = vpop.f32.mrf.mxu0
    %v213 = vadd.f32 0.0, %v212
    %v214 = vpop.f32.mrf.mxu0
    %v215 = vpop.f32.mrf.mxu0
    %v216 = vadd.f32 0.0, %v215
    %v217 = vpop.f32.mrf.mxu0
    %218 = vdwg.mxu0
    %v219 = vmax.f32 %v213, 0.0
    %v220 = vmax.f32 %v216, 0.0
    %v221 = vpack.c.bf16 %v220, %v219
    %v222 = vld [vmem:[%s3] sm:$0xf]
    %v223 = vld [vmem:[%s3 + $0x4] sm:$0xf]
    %v224 = vld [vmem:[%s3 + $0x8] sm:$0xf]
    %v225 = vld [vmem:[%s3 + $0xc] sm:$0xf]
    %v226 = vld [vmem:[%s3 + $0x10] sm:$0xf]
    %v227 = vld [vmem:[%s3 + $0x14] sm:$0xf]
    %v228 = vld [vmem:[%s3 + $0x18] sm:$0xf]
    %v229 = vld [vmem:[%s3 + $0x1c] sm:$0xf]
    %v230 = vld [vmem:[%s3 + $0x20] sm:$0xf]
    %v231 = vld [vmem:[%s3 + $0x24] sm:$0xf]
    %v232 = vld [vmem:[%s3 + $0x28] sm:$0xf]
    %v233 = vld [vmem:[%s3 + $0x2c] sm:$0xf]
    %v234 = vld [vmem:[%s3 + $0x30] sm:$0xf]
    %v235 = vld [vmem:[%s3 + $0x34] sm:$0xf]
    %v236 = vld [vmem:[%s3 + $0x38] sm:$0xf]
    %v237 = vld [vmem:[%s3 + $0x3c] sm:$0xf]
    %v254 = vunpack.c.l.b16 %v222
    %v255 = vunpack.c.l.b16 %v223
    %v256 = vunpack.c.l.b16 %v224
    %v257 = vunpack.c.l.b16 %v225
    %v258 = vunpack.c.l.b16 %v226
    %v259 = vunpack.c.l.b16 %v227
    %v260 = vunpack.c.l.b16 %v228
    %v261 = vunpack.c.l.b16 %v229
    %v262 = vunpack.c.l.b16 %v230
    %v263 = vunpack.c.l.b16 %v231
    %v264 = vunpack.c.l.b16 %v232
    %v265 = vunpack.c.l.b16 %v233
    %v266 = vunpack.c.l.b16 %v234
    %v267 = vunpack.c.l.b16 %v235
    %v268 = vunpack.c.l.b16 %v236
    %v269 = vunpack.c.l.b16 %v237
    %v270 = vpack.c.b16 %v255, %v254
    %v271 = vpack.c.b16 %v257, %v256
    %v272 = vpack.c.b16 %v259, %v258
    %v273 = vpack.c.b16 %v261, %v260
    %v274 = vpack.c.b16 %v263, %v262
    %v275 = vpack.c.b16 %v265, %v264
    %v276 = vpack.c.b16 %v267, %v266
    %v277 = vpack.c.b16 %v269, %v268
    %286 = vmatprep.subr.bf16.mxu0 0
    %287 = vmatpush1.bf16.msra.mxu0 %v277
    %288 = vmatprep.subr.bf16.mxu0 0
    %289 = vmatpush1.bf16.msra.mxu0 %v276
    %290 = vmatprep.subr.bf16.mxu0 0
    %291 = vmatpush1.bf16.msra.mxu0 %v275
    %292 = vmatprep.subr.bf16.mxu0 0
    %293 = vmatpush1.bf16.msra.mxu0 %v274
    %294 = vmatprep.subr.bf16.mxu0 0
    %295 = vmatpush1.bf16.msra.mxu0 %v273
    %296 = vmatprep.subr.bf16.mxu0 0
    %297 = vmatpush1.bf16.msra.mxu0 %v272
    %298 = vmatprep.subr.bf16.mxu0 0
    %299 = vmatpush1.bf16.msra.mxu0 %v271
    %300 = vmatprep.subr.bf16.mxu0 0
    %301 = vmatpush1.bf16.msra.mxu0 %v270
    %302 = vmatprep.subr.bf16.mxu0 0
    %303 = vmatpush2.bf16.msra.mxu0 0
    %304 = vmatprep.subr.bf16.mxu0 0
    %305 = vmatpush2.bf16.msra.mxu0 0
    %306 = vmatprep.subr.bf16.mxu0 0
    %307 = vmatpush2.bf16.msra.mxu0 0
    %308 = vmatprep.subr.bf16.mxu0 0
    %309 = vmatpush2.bf16.msra.mxu0 0
    %310 = vmatprep.subr.bf16.mxu0 0
    %311 = vmatpush2.bf16.msra.mxu0 0
    %312 = vmatprep.subr.bf16.mxu0 0
    %313 = vmatpush2.bf16.msra.mxu0 0
    %314 = vmatprep.subr.bf16.mxu0 0
    %315 = vmatpush2.bf16.msra.mxu0 0
    %316 = vmatprep.subr.bf16.mxu0 0
    %317 = vmatpush2.bf16.msra.mxu0 0
    %318 = vmatprep.mubr.bf16.mxu0 0
    %319 = vmatmul.mubr.bf16.gmra.mxu0 %v221
    %v320 = vpop.f32.mrf.mxu0
    %v321 = vadd.f32 0.0, %v320
    %v322 = vpop.f32.mrf.mxu0
    %v323 = vpop.f32.mrf.mxu0
    %v324 = vadd.f32 0.0, %v323
    %v325 = vpop.f32.mrf.mxu0
    %326 = vdwg.mxu0
    %v327 = vpack.c.bf16 %v324, %v321
    %v329 = vunpack.c.l.b16 %v327
    %v330 = vunpack.c.h.b16 %v327
    %v331 = vpack.c.b16 %v329, %v329
    %v332 = vpack.c.b16 %v330, %v330
    %vm335 = vcmask 125952
    %336 = vst.msk [vmem:[#allocation7] sm:$0xf] %vm335, %v331
    %337 = vst.msk [vmem:[#allocation7 + $0x4] sm:$0xf] %vm335, %v332
    // Predicated region
    $region26: #{tpu_custom_call.1} parent=1 // pred_check
      _
    $region27: #{tpu_custom_call.1} parent=1 // pred_check_branch
      %339 = sbr.rel (0) target = $region29
    $region28: #{tpu_custom_call.1} parent=1 // pred_region
      %s341 = ssub.s32 128, 128
      %342 = vsyncadd [#allocation4], %s341
      %s343 = sshll.u32 [#allocation7], 4
      %s344 = int_to_ptr.vmem [resolvable:$true] %s343
      %349 = dma.vmem_to_hbm [thread:$0]  %s344, 128, %s4, [#allocation4], 64, 64, 4
    $region29: #{tpu_custom_call.1} parent=1 // pred_fallthru
      _
    // Predicated region
    $region30: #{tpu_custom_call.1} parent=1 // pred_check
      _
    $region31: #{tpu_custom_call.1} parent=1 // pred_check_branch
      %351 = sbr.rel (0) target = $region33
    $region32: #{tpu_custom_call.1} parent=1 // pred_region
      %352 = dma.done [#allocation4], 128
    $region33: #{tpu_custom_call.1} parent=1 // pred_fallthru
      _
    %353 = vsyncpa [#allocation3], 1
    %354 = vsyncpa [#allocation6], 1
    %355 = vsyncpa [#allocation4], 1

</llo_original>
